<compile_context>
chip_gen: v5e
topology: v5e:2x2
jax: 0.10.0
libtpu: 0.0.40
codegen_flags: <defaults>
</compile_context>

<pallas_src>
import functools

import jax
import jax.numpy as jnp
from jax import lax
from jax.experimental import pallas as pl
from jax.experimental.pallas import tpu as pltpu


# ----------------------------------------------------------------------------
# Fused MHSA kernel (qkv linear + attention + head-merge + output projection)
# ----------------------------------------------------------------------------
def _mhsa_fused_kernel(scale_ref, x_ref, wqkv_ref, bqkv_ref, wproj_ref,
                       bproj_ref, bias_ref, o_ref, qkv_scr, attn_scr, *,
                       tb, n, heads, head_scale, mm_dtype):
    """One grid step = TB batch elements, all heads batched.

    Block shapes:
      x_ref:     (TB*N, C)   rows of the (B*N, C) input slab
      wqkv_ref:  (C, 3C)     bqkv_ref:  (1, 3C)
      wproj_ref: (C, C)      bproj_ref: (1, C)
      bias_ref:  (H, N, N)   scale_ref: (1,) f32 in SMEM (bias_scale)
      o_ref:     (TB*N, C)
    Scratch:
      qkv_scr:   (TB, N, 3C) f32 VMEM
      attn_scr:  (TB, N, C)  f32 VMEM
    """
    C = x_ref.shape[-1]
    dh = C // heads
    bias_scale = scale_ref[0]

    # ---- (1) fused qkv projection: one (TB*N, C) @ (C, 3C) MXU matmul -----
    x = x_ref[...]                                                  # (TB*N, C)
    qkv = jnp.dot(x.astype(mm_dtype), wqkv_ref[...].astype(mm_dtype),
                  preferred_element_type=jnp.float32) + bqkv_ref[...]
    qkv_scr[...] = qkv.reshape(tb, n, 3 * C)

    # ---- (2) bias scaled once per grid step (hoisted out of all loops) ----
    scaled_bias = bias_scale * bias_ref[...]                        # (H, N, N)

    # ---- (3) attention: fori_loop over batch elements, heads batched ------
    def attn_body(b, carry):
        qkv_b = qkv_scr[b]                                          # (N, 3C)
        # Relayout to head-major (H, N, dh); columns are ordered [q | k | v],
        # each grouped by head, matching the PyTorch reshape/permute.
        q = jnp.stack([qkv_b[:, h * dh:(h + 1) * dh]
                       for h in range(heads)], axis=0) * head_scale
        k = jnp.stack([qkv_b[:, C + h * dh:C + (h + 1) * dh]
                       for h in range(heads)], axis=0)
        v = jnp.stack([qkv_b[:, 2 * C + h * dh:2 * C + (h + 1) * dh]
                       for h in range(heads)], axis=0)

        # Batched scores over all heads: (H, N, dh) x (H, N, dh) -> (H, N, N)
        s = lax.dot_general(q.astype(mm_dtype), k.astype(mm_dtype),
                            dimension_numbers=(((2,), (2,)), ((0,), (0,))),
                            preferred_element_type=jnp.float32)
        s = s + scaled_bias

        # f32 softmax over the whole (H, N, N) block.
        m = jnp.max(s, axis=-1, keepdims=True)
        p = jnp.exp(s - m)
        l = jnp.sum(p, axis=-1, keepdims=True)

        # Batched PV: (H, N, N) x (H, N, dh) -> (H, N, dh)
        o = lax.dot_general(p.astype(mm_dtype), v.astype(mm_dtype),
                            dimension_numbers=(((2,), (1,)), ((0,), (0,))),
                            preferred_element_type=jnp.float32)
        o = o * pl.reciprocal(l)                    # exact reciprocal (EUP)

        # Head-merge into the (N, C) row slab of the scratch.
        for h in range(heads):
            attn_scr[b, :, h * dh:(h + 1) * dh] = o[h]
        return carry

    lax.fori_loop(0, tb, attn_body, 0)

    # ---- (4) single output projection over all TB*N rows ------------------
    attn = attn_scr[...].reshape(tb * n, C)
    out = jnp.dot(attn.astype(mm_dtype), wproj_ref[...].astype(mm_dtype),
                  preferred_element_type=jnp.float32) + bproj_ref[...]
    o_ref[...] = out.astype(o_ref.dtype)


def _choose_block_b(B, N, target_rows=256):
    """Largest divisor of B with block_b*N <= target_rows, preferring >=2 grid
    steps (v7x shards the 'parallel' grid axis across its 2 TensorCores)."""
    cap = max(1, target_rows // max(N, 1))
    divisors = [d for d in range(1, B + 1) if B % d == 0]
    candidates = [d for d in divisors if d <= cap] or [1]
    tb = max(candidates)
    if B // tb < 2:
        smaller = [d for d in candidates if B // d >= 2]
        if smaller:
            tb = max(smaller)
    return tb


def mhsa_forward(x, params, heads, *, block_b=None, matmul_dtype=jnp.float32):
    """Fused MHSA forward: one pallas_call, grid over blocks of batch elements.

    matmul_dtype: set to jnp.bfloat16 on v6e/v7x for MXU-native operands
    (softmax/bias math stays f32); keep f32 on v5e / for exact parity.
    """
    B, N, C = x.shape
    dh = C // heads
    head_scale = dh ** (-0.5)

    tb = block_b if block_b is not None else _choose_block_b(B, N)
    assert B % tb == 0, "block_b must divide the batch size"
    grid_b = B // tb

    # Bias: pass the parameter directly when it already matches N; otherwise a
    # single constant slice (in production, hoist this outside the hot path —
    # it is the same slice of a parameter on every call).
    bias = params["bias"]
    if bias.shape[1] == N and bias.shape[2] == N:
        bias_sub = bias
    else:
        bias_sub = bias[:, :N, :N]                                   # (H, N, N)

    # Present x / out as dense (B*N, C) slabs (free XLA reshapes).
    x2 = x.reshape(B * N, C)

    kern = functools.partial(_mhsa_fused_kernel, tb=tb, n=N, heads=heads,
                             head_scale=head_scale, mm_dtype=matmul_dtype)

    out2 = pl.pallas_call(
        kern,
        out_shape=jax.ShapeDtypeStruct((B * N, C), x.dtype),
        grid=(grid_b,),
        in_specs=[
            pl.BlockSpec(memory_space=pltpu.SMEM),                  # bias_scale
            pl.BlockSpec((tb * N, C), lambda i: (i, 0)),            # x rows
            pl.BlockSpec((C, 3 * C), lambda i: (0, 0)),             # w_qkv_t
            pl.BlockSpec((1, 3 * C), lambda i: (0, 0)),             # b_qkv
            pl.BlockSpec((C, C), lambda i: (0, 0)),                 # w_proj_t
            pl.BlockSpec((1, C), lambda i: (0, 0)),                 # b_proj
            pl.BlockSpec((heads, N, N), lambda i: (0, 0, 0)),       # bias
        ],
        out_specs=pl.BlockSpec((tb * N, C), lambda i: (i, 0)),
        scratch_shapes=[
            pltpu.VMEM((tb, N, 3 * C), jnp.float32),                # qkv
            pltpu.VMEM((tb, N, C), jnp.float32),                    # attn out
        ],
        compiler_params=pltpu.CompilerParams(
            # Batch-block axis: shards across both TensorCores on v7x; a plain
            # sequential loop on single-TC v5e/v6e.
            dimension_semantics=("parallel",)),
    )(
        params["bias_scale"].reshape(1),
        x2,
        params["w_qkv_t"],
        params["b_qkv"].reshape(1, 3 * C),
        params["w_proj_t"],
        params["b_proj"].reshape(1, C),
        bias_sub,
    )
    return out2.reshape(B, N, C)


# ----------------------------------------------------------------------------
# Pure-JAX reference (for verification)
# ----------------------------------------------------------------------------
def mhsa_reference(x, params, heads):
    B, N, C = x.shape
    dh = C // heads
    scale = dh ** (-0.5)
    qkv = x @ params["w_qkv_t"] + params["b_qkv"]
    qkv = qkv.reshape(B, N, 3, heads, dh).transpose(2, 0, 3, 1, 4)
    q, k, v = qkv[0], qkv[1], qkv[2]
    attn = jnp.einsum("bhnd,bhmd->bhnm", q, k) * scale
    attn = attn + params["bias_scale"] * params["bias"][None, :, :N, :N]
    attn = jax.nn.softmax(attn, axis=-1)
    o = jnp.einsum("bhnm,bhmd->bhnd", attn, v)
    o = o.transpose(0, 2, 1, 3).reshape(B, N, C)
    return o @ params["w_proj_t"] + params["b_proj"]


# ----------------------------------------------------------------------------
# Deterministic parameter init + run
# ----------------------------------------------------------------------------
if __name__ == "__main__":
    B, N, dim, heads = 8, 16, 32, 4
    key = jax.random.PRNGKey(0)
    k1, k2, k3, k4, k5, k6 = jax.random.split(key, 6)

    params = {
        # nn.Linear(dim, 3*dim): weight (3C, C) -> stored transposed (C, 3C)
        "w_qkv_t": jax.random.normal(k1, (dim, 3 * dim), jnp.float32) * 0.05,
        "b_qkv": jax.random.normal(k2, (3 * dim,), jnp.float32) * 0.05,
        # nn.Linear(dim, dim)
        "w_proj_t": jax.random.normal(k3, (dim, dim), jnp.float32) * 0.05,
        "b_proj": jax.random.normal(k4, (dim,), jnp.float32) * 0.05,
        # per-head 65x65 additive bias parameter
        "bias": jax.random.normal(k5, (heads, 65, 65), jnp.float32) * 0.1,
        "bias_scale": jnp.array(1.0, jnp.float32),
    }

    x = jax.random.normal(k6, (B, N, dim), jnp.float32)

    out = jax.block_until_ready(mhsa_forward(x, params, heads))
    ref = jax.block_until_ready(mhsa_reference(x, params, heads))

    assert out.shape == (B, N, dim)
    assert jnp.allclose(out, ref, atol=1e-3, rtol=1e-3), (
        f"max abs diff = {jnp.max(jnp.abs(out - ref))}"
    )
    print("KERNEL_OK")
</pallas_src>

<mosaic_0001>
module attributes {stable_mosaic.version = 11 : i64} {
  func.func @_mhsa_fused_kernel(%arg0: i32, %arg1: memref<1xf32, #tpu.memory_space<smem>>, %arg2: memref<64x32xf32, #tpu.memory_space<vmem>>, %arg3: memref<32x96xf32, #tpu.memory_space<vmem>>, %arg4: memref<1x96xf32, #tpu.memory_space<vmem>>, %arg5: memref<32x32xf32, #tpu.memory_space<vmem>>, %arg6: memref<1x32xf32, #tpu.memory_space<vmem>>, %arg7: memref<4x16x16xf32, #tpu.memory_space<vmem>>, %arg8: memref<64x32xf32, #tpu.memory_space<vmem>>, %arg9: memref<4x16x96xf32, #tpu.memory_space<vmem>>, %arg10: memref<4x16x32xf32, #tpu.memory_space<vmem>>) attributes {dimension_semantics = [#tpu.dimension_semantics<parallel>], iteration_bounds = array<i64: 2>, scalar_prefetch = 0 : i64, scratch_operands = 2 : i64, tpu.core_type = #tpu.core_type<tc>, window_params = [{transform_indices = @transform_0, window_bounds = array<i64: 1>}, {transform_indices = @transform_1, window_bounds = array<i64: 64, 32>}, {pipeline_mode = #tpu.pipeline_mode<synchronous>, transform_indices = @transform_2, window_bounds = array<i64: 32, 96>}, {pipeline_mode = #tpu.pipeline_mode<synchronous>, transform_indices = @transform_3, window_bounds = array<i64: 1, 96>}, {pipeline_mode = #tpu.pipeline_mode<synchronous>, transform_indices = @transform_4, window_bounds = array<i64: 32, 32>}, {pipeline_mode = #tpu.pipeline_mode<synchronous>, transform_indices = @transform_5, window_bounds = array<i64: 1, 32>}, {pipeline_mode = #tpu.pipeline_mode<synchronous>, transform_indices = @transform_6, window_bounds = array<i64: 4, 16, 16>}, {transform_indices = @transform_7, window_bounds = array<i64: 64, 32>}]} {
    %c0 = arith.constant 0 : index
    %0 = memref.load %arg1[%c0] : memref<1xf32, #tpu.memory_space<smem>>
    %c0_0 = arith.constant 0 : index
    %c0_1 = arith.constant 0 : index
    %1 = vector.load %arg2[%c0_0, %c0_1] : memref<64x32xf32, #tpu.memory_space<vmem>>, vector<64x32xf32>
    %c0_2 = arith.constant 0 : index
    %c0_3 = arith.constant 0 : index
    %2 = vector.load %arg3[%c0_2, %c0_3] : memref<32x96xf32, #tpu.memory_space<vmem>>, vector<32x96xf32>
    %cst = arith.constant dense<0.000000e+00> : vector<64x96xf32>
    %3 = tpu.matmul %1, %2, %cst {dimension_numbers = #tpu.dot_dimension_numbers<[1], [0], [0], [1], [0, 0, 1, 1], [], []>} : vector<64x32xf32>, vector<32x96xf32>, vector<64x96xf32> -> vector<64x96xf32>
    %c0_4 = arith.constant 0 : index
    %c0_5 = arith.constant 0 : index
    %4 = vector.load %arg4[%c0_4, %c0_5] : memref<1x96xf32, #tpu.memory_space<vmem>>, vector<1x96xf32>
    %5 = vector.broadcast %4 : vector<1x96xf32> to vector<64x96xf32>
    %6 = arith.addf %3, %5 : vector<64x96xf32>
    %7 = vector.shape_cast %6 : vector<64x96xf32> to vector<4x16x96xf32>
    %c0_6 = arith.constant 0 : index
    %c0_7 = arith.constant 0 : index
    %c0_8 = arith.constant 0 : index
    %8 = vector.load %arg9[%c0_6, %c0_7, %c0_8] : memref<4x16x96xf32, #tpu.memory_space<vmem>>, vector<4x16x96xf32>
    tpu.vector_store %arg9[%c0_6, %c0_7, %c0_8], %7 {strides = array<i32>} : memref<4x16x96xf32, #tpu.memory_space<vmem>>, vector<4x16x96xf32>,
    %c0_9 = arith.constant 0 : index
    %c0_10 = arith.constant 0 : index
    %c0_11 = arith.constant 0 : index
    %9 = vector.load %arg7[%c0_9, %c0_10, %c0_11] : memref<4x16x16xf32, #tpu.memory_space<vmem>>, vector<4x16x16xf32>
    %10 = vector.broadcast %0 : f32 to vector<4x16x16xf32>
    %11 = arith.mulf %10, %9 : vector<4x16x16xf32>
    %c0_i32 = arith.constant 0 : i32
    %c4_i32 = arith.constant 4 : i32
    %12 = arith.addi %c0_i32, %c4_i32 : i32
    %c1_i32 = arith.constant 1 : i32
    scf.for %arg11 = %c0_i32 to %12 step %c1_i32  : i32 {
      %21 = arith.index_cast %arg11 : i32 to index
      %c0_23 = arith.constant 0 : index
      %c0_24 = arith.constant 0 : index
      %22 = vector.load %arg9[%21, %c0_23, %c0_24] : memref<4x16x96xf32, #tpu.memory_space<vmem>>, vector<1x16x96xf32>
      %23 = vector.shape_cast %22 : vector<1x16x96xf32> to vector<16x96xf32>
      %24 = vector.extract_strided_slice %23 {offsets = [0, 0], sizes = [16, 8], strides = [1, 1]} : vector<16x96xf32> to vector<16x8xf32>
      %25 = vector.extract_strided_slice %23 {offsets = [0, 8], sizes = [16, 8], strides = [1, 1]} : vector<16x96xf32> to vector<16x8xf32>
      %26 = vector.extract_strided_slice %23 {offsets = [0, 16], sizes = [16, 8], strides = [1, 1]} : vector<16x96xf32> to vector<16x8xf32>
      %27 = vector.extract_strided_slice %23 {offsets = [0, 24], sizes = [16, 8], strides = [1, 1]} : vector<16x96xf32> to vector<16x8xf32>
      %28 = vector.shape_cast %24 : vector<16x8xf32> to vector<1x16x8xf32>
      %29 = vector.shape_cast %25 : vector<16x8xf32> to vector<1x16x8xf32>
      %30 = vector.shape_cast %26 : vector<16x8xf32> to vector<1x16x8xf32>
      %31 = vector.shape_cast %27 : vector<16x8xf32> to vector<1x16x8xf32>
      %32 = tpu.concatenate %28, %29, %30, %31 in 0 : vector<1x16x8xf32>, vector<1x16x8xf32>, vector<1x16x8xf32>, vector<1x16x8xf32> -> vector<4x16x8xf32>
      %cst_25 = arith.constant 0.353553385 : f32
      %33 = vector.broadcast %cst_25 : f32 to vector<4x16x8xf32>
      %34 = arith.mulf %32, %33 : vector<4x16x8xf32>
      %35 = vector.extract_strided_slice %23 {offsets = [0, 32], sizes = [16, 8], strides = [1, 1]} : vector<16x96xf32> to vector<16x8xf32>
      %36 = vector.extract_strided_slice %23 {offsets = [0, 40], sizes = [16, 8], strides = [1, 1]} : vector<16x96xf32> to vector<16x8xf32>
      %37 = vector.extract_strided_slice %23 {offsets = [0, 48], sizes = [16, 8], strides = [1, 1]} : vector<16x96xf32> to vector<16x8xf32>
      %38 = vector.extract_strided_slice %23 {offsets = [0, 56], sizes = [16, 8], strides = [1, 1]} : vector<16x96xf32> to vector<16x8xf32>
      %39 = vector.shape_cast %35 : vector<16x8xf32> to vector<1x16x8xf32>
      %40 = vector.shape_cast %36 : vector<16x8xf32> to vector<1x16x8xf32>
      %41 = vector.shape_cast %37 : vector<16x8xf32> to vector<1x16x8xf32>
      %42 = vector.shape_cast %38 : vector<16x8xf32> to vector<1x16x8xf32>
      %43 = tpu.concatenate %39, %40, %41, %42 in 0 : vector<1x16x8xf32>, vector<1x16x8xf32>, vector<1x16x8xf32>, vector<1x16x8xf32> -> vector<4x16x8xf32>
      %44 = vector.extract_strided_slice %23 {offsets = [0, 64], sizes = [16, 8], strides = [1, 1]} : vector<16x96xf32> to vector<16x8xf32>
      %45 = vector.extract_strided_slice %23 {offsets = [0, 72], sizes = [16, 8], strides = [1, 1]} : vector<16x96xf32> to vector<16x8xf32>
      %46 = vector.extract_strided_slice %23 {offsets = [0, 80], sizes = [16, 8], strides = [1, 1]} : vector<16x96xf32> to vector<16x8xf32>
      %47 = vector.extract_strided_slice %23 {offsets = [0, 88], sizes = [16, 8], strides = [1, 1]} : vector<16x96xf32> to vector<16x8xf32>
      %48 = vector.shape_cast %44 : vector<16x8xf32> to vector<1x16x8xf32>
      %49 = vector.shape_cast %45 : vector<16x8xf32> to vector<1x16x8xf32>
      %50 = vector.shape_cast %46 : vector<16x8xf32> to vector<1x16x8xf32>
      %51 = vector.shape_cast %47 : vector<16x8xf32> to vector<1x16x8xf32>
      %52 = tpu.concatenate %48, %49, %50, %51 in 0 : vector<1x16x8xf32>, vector<1x16x8xf32>, vector<1x16x8xf32>, vector<1x16x8xf32> -> vector<4x16x8xf32>
      %cst_26 = arith.constant dense<0.000000e+00> : vector<4x16x16xf32>
      %53 = tpu.matmul %34, %43, %cst_26 {dimension_numbers = #tpu.dot_dimension_numbers<[2], [2], [1], [1], [0, 0, 0, 1, 1, 1], [0], [0]>} : vector<4x16x8xf32>, vector<4x16x8xf32>, vector<4x16x16xf32> -> vector<4x16x16xf32>
      %54 = arith.addf %53, %11 : vector<4x16x16xf32>
      %cst_27 = arith.constant dense<0xFF800000> : vector<4x16xf32>
      %55 = vector.multi_reduction <maximumf>, %54, %cst_27 [2] : vector<4x16x16xf32> to vector<4x16xf32>
      %56 = vector.shape_cast %55 : vector<4x16xf32> to vector<4x16x1xf32>
      %57 = vector.broadcast %56 : vector<4x16x1xf32> to vector<4x16x16xf32>
      %58 = arith.subf %54, %57 : vector<4x16x16xf32>
      %59 = math.exp %58 : vector<4x16x16xf32>
      %cst_28 = arith.constant dense<0.000000e+00> : vector<4x16xf32>
      %60 = vector.multi_reduction <add>, %59, %cst_28 [2] : vector<4x16x16xf32> to vector<4x16xf32>
      %61 = vector.shape_cast %60 : vector<4x16xf32> to vector<4x16x1xf32>
      %cst_29 = arith.constant dense<0.000000e+00> : vector<4x16x8xf32>
      %62 = tpu.matmul %59, %52, %cst_29 {dimension_numbers = #tpu.dot_dimension_numbers<[2], [1], [1], [2], [0, 0, 0, 1, 1, 2], [0], [0]>} : vector<4x16x16xf32>, vector<4x16x8xf32>, vector<4x16x8xf32> -> vector<4x16x8xf32>
      %63 = tpu.reciprocal %61 : vector<4x16x1xf32> -> vector<4x16x1xf32>
      %64 = vector.broadcast %63 : vector<4x16x1xf32> to vector<4x16x8xf32>
      %65 = arith.mulf %62, %64 : vector<4x16x8xf32>
      %66 = vector.extract_strided_slice %65 {offsets = [0, 0, 0], sizes = [1, 16, 8], strides = [1, 1, 1]} : vector<4x16x8xf32> to vector<1x16x8xf32>
      %67 = vector.shape_cast %66 : vector<1x16x8xf32> to vector<16x8xf32>
      %68 = arith.index_cast %arg11 : i32 to index
      %c0_30 = arith.constant 0 : index
      %c0_31 = arith.constant 0 : index
      %69 = vector.load %arg10[%68, %c0_30, %c0_31] : memref<4x16x32xf32, #tpu.memory_space<vmem>>, vector<1x16x8xf32>
      %70 = vector.shape_cast %69 : vector<1x16x8xf32> to vector<16x8xf32>
      %71 = vector.shape_cast %67 : vector<16x8xf32> to vector<1x16x8xf32>
      tpu.vector_store %arg10[%68, %c0_30, %c0_31], %71 {strides = array<i32>} : memref<4x16x32xf32, #tpu.memory_space<vmem>>, vector<1x16x8xf32>,
      %72 = vector.extract_strided_slice %65 {offsets = [1, 0, 0], sizes = [1, 16, 8], strides = [1, 1, 1]} : vector<4x16x8xf32> to vector<1x16x8xf32>
      %73 = vector.shape_cast %72 : vector<1x16x8xf32> to vector<16x8xf32>
      %74 = arith.index_cast %arg11 : i32 to index
      %c0_32 = arith.constant 0 : index
      %c8 = arith.constant 8 : index
      %75 = vector.load %arg10[%74, %c0_32, %c8] : memref<4x16x32xf32, #tpu.memory_space<vmem>>, vector<1x16x8xf32>
      %76 = vector.shape_cast %75 : vector<1x16x8xf32> to vector<16x8xf32>
      %77 = vector.shape_cast %73 : vector<16x8xf32> to vector<1x16x8xf32>
      tpu.vector_store %arg10[%74, %c0_32, %c8], %77 {strides = array<i32>} : memref<4x16x32xf32, #tpu.memory_space<vmem>>, vector<1x16x8xf32>,
      %78 = vector.extract_strided_slice %65 {offsets = [2, 0, 0], sizes = [1, 16, 8], strides = [1, 1, 1]} : vector<4x16x8xf32> to vector<1x16x8xf32>
      %79 = vector.shape_cast %78 : vector<1x16x8xf32> to vector<16x8xf32>
      %80 = arith.index_cast %arg11 : i32 to index
      %c0_33 = arith.constant 0 : index
      %c16 = arith.constant 16 : index
      %81 = vector.load %arg10[%80, %c0_33, %c16] : memref<4x16x32xf32, #tpu.memory_space<vmem>>, vector<1x16x8xf32>
      %82 = vector.shape_cast %81 : vector<1x16x8xf32> to vector<16x8xf32>
      %83 = vector.shape_cast %79 : vector<16x8xf32> to vector<1x16x8xf32>
      tpu.vector_store %arg10[%80, %c0_33, %c16], %83 {strides = array<i32>} : memref<4x16x32xf32, #tpu.memory_space<vmem>>, vector<1x16x8xf32>,
      %84 = vector.extract_strided_slice %65 {offsets = [3, 0, 0], sizes = [1, 16, 8], strides = [1, 1, 1]} : vector<4x16x8xf32> to vector<1x16x8xf32>
      %85 = vector.shape_cast %84 : vector<1x16x8xf32> to vector<16x8xf32>
      %86 = arith.index_cast %arg11 : i32 to index
      %c0_34 = arith.constant 0 : index
      %c24 = arith.constant 24 : index
      %87 = vector.load %arg10[%86, %c0_34, %c24] : memref<4x16x32xf32, #tpu.memory_space<vmem>>, vector<1x16x8xf32>
      %88 = vector.shape_cast %87 : vector<1x16x8xf32> to vector<16x8xf32>
      %89 = vector.shape_cast %85 : vector<16x8xf32> to vector<1x16x8xf32>
      tpu.vector_store %arg10[%86, %c0_34, %c24], %89 {strides = array<i32>} : memref<4x16x32xf32, #tpu.memory_space<vmem>>, vector<1x16x8xf32>,
    }
    %c4_i32_12 = arith.constant 4 : i32
    %c0_13 = arith.constant 0 : index
    %c0_14 = arith.constant 0 : index
    %c0_15 = arith.constant 0 : index
    %13 = vector.load %arg10[%c0_13, %c0_14, %c0_15] : memref<4x16x32xf32, #tpu.memory_space<vmem>>, vector<4x16x32xf32>
    %14 = vector.shape_cast %13 : vector<4x16x32xf32> to vector<64x32xf32>
    %c0_16 = arith.constant 0 : index
    %c0_17 = arith.constant 0 : index
    %15 = vector.load %arg5[%c0_16, %c0_17] : memref<32x32xf32, #tpu.memory_space<vmem>>, vector<32x32xf32>
    %cst_18 = arith.constant dense<0.000000e+00> : vector<64x32xf32>
    %16 = tpu.matmul %14, %15, %cst_18 {dimension_numbers = #tpu.dot_dimension_numbers<[1], [0], [0], [1], [0, 0, 1, 1], [], []>} : vector<64x32xf32>, vector<32x32xf32>, vector<64x32xf32> -> vector<64x32xf32>
    %c0_19 = arith.constant 0 : index
    %c0_20 = arith.constant 0 : index
    %17 = vector.load %arg6[%c0_19, %c0_20] : memref<1x32xf32, #tpu.memory_space<vmem>>, vector<1x32xf32>
    %18 = vector.broadcast %17 : vector<1x32xf32> to vector<64x32xf32>
    %19 = arith.addf %16, %18 : vector<64x32xf32>
    %c0_21 = arith.constant 0 : index
    %c0_22 = arith.constant 0 : index
    %20 = vector.load %arg8[%c0_21, %c0_22] : memref<64x32xf32, #tpu.memory_space<vmem>>, vector<64x32xf32>
    tpu.vector_store %arg8[%c0_21, %c0_22], %19 {strides = array<i32>} : memref<64x32xf32, #tpu.memory_space<vmem>>, vector<64x32xf32>,
    return
  }
  func.func @transform_0(%arg0: i32) -> i32 {
    %c0_i32 = arith.constant 0 : i32
    %c0_i32_0 = arith.constant 0 : i32
    return %c0_i32 : i32
  }
  func.func @transform_1(%arg0: i32) -> (i32, i32) {
    %c0_i32 = arith.constant 0 : i32
    %c0_i32_0 = arith.constant 0 : i32
    return %arg0, %c0_i32 : i32, i32
  }
  func.func @transform_2(%arg0: i32) -> (i32, i32) {
    %c0_i32 = arith.constant 0 : i32
    %c0_i32_0 = arith.constant 0 : i32
    %c0_i32_1 = arith.constant 0 : i32
    return %c0_i32, %c0_i32_0 : i32, i32
  }
  func.func @transform_3(%arg0: i32) -> (i32, i32) {
    %c0_i32 = arith.constant 0 : i32
    %c0_i32_0 = arith.constant 0 : i32
    %c0_i32_1 = arith.constant 0 : i32
    return %c0_i32, %c0_i32_0 : i32, i32
  }
  func.func @transform_4(%arg0: i32) -> (i32, i32) {
    %c0_i32 = arith.constant 0 : i32
    %c0_i32_0 = arith.constant 0 : i32
    %c0_i32_1 = arith.constant 0 : i32
    return %c0_i32, %c0_i32_0 : i32, i32
  }
  func.func @transform_5(%arg0: i32) -> (i32, i32) {
    %c0_i32 = arith.constant 0 : i32
    %c0_i32_0 = arith.constant 0 : i32
    %c0_i32_1 = arith.constant 0 : i32
    return %c0_i32, %c0_i32_0 : i32, i32
  }
  func.func @transform_6(%arg0: i32) -> (i32, i32, i32) {
    %c0_i32 = arith.constant 0 : i32
    %c0_i32_0 = arith.constant 0 : i32
    %c0_i32_1 = arith.constant 0 : i32
    %c0_i32_2 = arith.constant 0 : i32
    return %c0_i32, %c0_i32_0, %c0_i32_1 : i32, i32, i32
  }
  func.func @transform_7(%arg0: i32) -> (i32, i32) {
    %c0_i32 = arith.constant 0 : i32
    %c0_i32_0 = arith.constant 0 : i32
    return %arg0, %c0_i32 : i32, i32
  }
}

</mosaic_0001>

<llo_original>
// kernel: tpu_custom_call.1
$region0: #{tpu_custom_call.1}
  #allocation0 [shape = 'u32[]', space=smem, size = 0x4, offset = 0x4, fixed_abs, tag = 'smem constant byte address 0x4 - core index']
  #allocation1 [shape = 'u32[72,128]{1,0:T(1,128)}', space=vmem, size = 0x9000, scoped, tag = 'internal scratch']
  #allocation2 [shape = 'f32[4,16,96]{2,1,0:T(8,128)}', space=vmem, size = 0x8000, scoped, tag = 'scratch operand']
  #allocation3 [shape = 'f32[4,16,32]{2,1,0:T(8,128)}', space=vmem, size = 0x8000, scoped, tag = 'scratch operand']
  #allocation4 [shape = 'f32[1]{0:T(128)S(6)}', space=smem, size = 0x200, scoped, tag = 'scoped memory for tpu_custom_call.1']
  %s0 = inlined_call_operand.<no memory space> [shape: f32[1], index: 0, kind: input, shape index: {}]
  %s1 = inlined_call_operand.vmem [shape: f32[128,32], index: 1, kind: input, shape index: {}]
  %s2 = inlined_call_operand.vmem [shape: f32[32,96], index: 2, kind: input, shape index: {}]
  %s3 = inlined_call_operand.vmem [shape: f32[1,96], index: 3, kind: input, shape index: {}]
  %s4 = inlined_call_operand.vmem [shape: f32[32,32], index: 4, kind: input, shape index: {}]
  %s5 = inlined_call_operand.vmem [shape: f32[1,32], index: 5, kind: input, shape index: {}]
  %s6 = inlined_call_operand.vmem [shape: f32[4,16,16], index: 6, kind: input, shape index: {}]
  %s7 = inlined_call_operand.vmem [shape: f32[128,32], index: 7, kind: output, shape index: {}]
  %s8 = sld [smem:[#allocation0]]
  $region68: #{tpu_custom_call.1} parent=0
    _
  %s10 = ssub.s32 1, %s8
  %s11 = scalar_select 0, %s10, %s8
  %12 = sst [smem:[#allocation4]] %s0
  loop: start=0, step=1, limit=4
  $region2: #{tpu_custom_call.1} parent=0 // loop_pre_header
    _
  $region3: #{tpu_custom_call.1} parent=0 // loop_header
    %s14 = sphi 0, %s18
    %p15 = scmp.ge.s32.totalorder %s14, 4
    %s22 = sphi 0, %s22
    %s24 = sphi 0, %s22
    %s25 = sphi 0, %s24
    %s39 = sphi 0, %s25
    %s45 = sphi 0, %s47
    %s48 = sphi 0, %s45
    %s49 = sphi 0, %s48
    %s65 = sphi 0, %s49
    %s69 = sphi 0, %s69
    %s71 = sphi 0, %s69
    %s72 = sphi 0, %s71
    %s86 = sphi 0, %s72
    %s90 = sphi 0, %s90
    %s92 = sphi 0, %s90
    %s93 = sphi 0, %s92
    %s107 = sphi 0, %s93
    %s111 = sphi 0, %s111
    %s113 = sphi 0, %s111
    %s114 = sphi 0, %s113
    %s128 = sphi 0, %s114
    %s132 = sphi 0, %s132
    %s134 = sphi 0, %s132
    %s135 = sphi 0, %s134
    %s149 = sphi 0, %s135
    %s153 = sphi 0, %s153
    %s155 = sphi 0, %s153
    %s156 = sphi 0, %s155
    %s170 = sphi 0, %s156
    %s176 = sphi 0, %s178
    %s179 = sphi 0, %s176
    %s180 = sphi 0, %s179
    %s196 = sphi 0, %s180
  $region4: #{tpu_custom_call.1} parent=0 // loop_header_branch
    %17 = sbr.rel (%p15) target = $region8
  $region5: #{tpu_custom_call.1} parent=0 // loop_body
    %s19 = ssub.s32 %s14, 1
    %s20 = ssub.s32 %s14, 2
    %s21 = sadd.s32 %s14, 1
    %s23 = sadd.s32 %s22, 1
    %p26 = scmp.eq.s32.totalorder %s14, 1
    %p27 = scmp.ne.s32.totalorder %s22, %s24
    %p28 = scmp.eq.s32.totalorder %s14, 0
    %p29 = por %p27, %p28
    %p30 = scmp.ne.s32.totalorder %s22, %s24
    %p31 = scmp.eq.s32.totalorder %s19, 1
    %p32 = por %p30, %p31
    %p33 = scmp.ne.s32.totalorder %s24, %s25
    %p34 = scmp.eq.s32.totalorder %s19, 0
    %p35 = por %p33, %p34
    %p36 = scmp.ne.s32.totalorder %s24, %s25
    %p37 = scmp.eq.s32.totalorder %s20, 1
    %p38 = por %p36, %p37
    %p40 = scmp.ne.s32.totalorder %s25, %s39
    %p41 = scmp.eq.s32.totalorder %s20, 0
    %p42 = por %p40, %p41
    %s43 = ssub.s32 %s14, %s21
    %p44 = scmp.eq.s32.totalorder %s43, 0
    %s46 = sadd.s32 %s45, 1
    %s47 = scalar_select %p44, %s45, %s46
    %p50 = pneg %p44
    %p51 = scmp.eq.s32.totalorder %s14, 1
    %p52 = por %p50, %p51
    %p53 = scmp.ne.s32.totalorder %s45, %s48
    %p54 = scmp.eq.s32.totalorder %s14, 0
    %p55 = por %p53, %p54
    %p56 = scmp.ne.s32.totalorder %s45, %s48
    %p57 = scmp.eq.s32.totalorder %s19, 1
    %p58 = por %p56, %p57
    %p59 = scmp.ne.s32.totalorder %s48, %s49
    %p60 = scmp.eq.s32.totalorder %s19, 0
    %p61 = por %p59, %p60
    %p62 = scmp.ne.s32.totalorder %s48, %s49
    %p63 = scmp.eq.s32.totalorder %s20, 1
    %p64 = por %p62, %p63
    %p66 = scmp.ne.s32.totalorder %s49, %s65
    %p67 = scmp.eq.s32.totalorder %s20, 0
    %p68 = por %p66, %p67
    %s70 = sadd.s32 %s69, 1
    %p73 = scmp.eq.s32.totalorder %s14, 1
    %p74 = scmp.ne.s32.totalorder %s69, %s71
    %p75 = scmp.eq.s32.totalorder %s14, 0
    %p76 = por %p74, %p75
    %p77 = scmp.ne.s32.totalorder %s69, %s71
    %p78 = scmp.eq.s32.totalorder %s19, 1
    %p79 = por %p77, %p78
    %p80 = scmp.ne.s32.totalorder %s71, %s72
    %p81 = scmp.eq.s32.totalorder %s19, 0
    %p82 = por %p80, %p81
    %p83 = scmp.ne.s32.totalorder %s71, %s72
    %p84 = scmp.eq.s32.totalorder %s20, 1
    %p85 = por %p83, %p84
    %p87 = scmp.ne.s32.totalorder %s72, %s86
    %p88 = scmp.eq.s32.totalorder %s20, 0
    %p89 = por %p87, %p88
    %s91 = sadd.s32 %s90, 1
    %p94 = scmp.eq.s32.totalorder %s14, 1
    %p95 = scmp.ne.s32.totalorder %s90, %s92
    %p96 = scmp.eq.s32.totalorder %s14, 0
    %p97 = por %p95, %p96
    %p98 = scmp.ne.s32.totalorder %s90, %s92
    %p99 = scmp.eq.s32.totalorder %s19, 1
    %p100 = por %p98, %p99
    %p101 = scmp.ne.s32.totalorder %s92, %s93
    %p102 = scmp.eq.s32.totalorder %s19, 0
    %p103 = por %p101, %p102
    %p104 = scmp.ne.s32.totalorder %s92, %s93
    %p105 = scmp.eq.s32.totalorder %s20, 1
    %p106 = por %p104, %p105
    %p108 = scmp.ne.s32.totalorder %s93, %s107
    %p109 = scmp.eq.s32.totalorder %s20, 0
    %p110 = por %p108, %p109
    %s112 = sadd.s32 %s111, 1
    %p115 = scmp.eq.s32.totalorder %s14, 1
    %p116 = scmp.ne.s32.totalorder %s111, %s113
    %p117 = scmp.eq.s32.totalorder %s14, 0
    %p118 = por %p116, %p117
    %p119 = scmp.ne.s32.totalorder %s111, %s113
    %p120 = scmp.eq.s32.totalorder %s19, 1
    %p121 = por %p119, %p120
    %p122 = scmp.ne.s32.totalorder %s113, %s114
    %p123 = scmp.eq.s32.totalorder %s19, 0
    %p124 = por %p122, %p123
    %p125 = scmp.ne.s32.totalorder %s113, %s114
    %p126 = scmp.eq.s32.totalorder %s20, 1
    %p127 = por %p125, %p126
    %p129 = scmp.ne.s32.totalorder %s114, %s128
    %p130 = scmp.eq.s32.totalorder %s20, 0
    %p131 = por %p129, %p130
    %s133 = sadd.s32 %s132, 1
    %p136 = scmp.eq.s32.totalorder %s14, 1
    %p137 = scmp.ne.s32.totalorder %s132, %s134
    %p138 = scmp.eq.s32.totalorder %s14, 0
    %p139 = por %p137, %p138
    %p140 = scmp.ne.s32.totalorder %s132, %s134
    %p141 = scmp.eq.s32.totalorder %s19, 1
    %p142 = por %p140, %p141
    %p143 = scmp.ne.s32.totalorder %s134, %s135
    %p144 = scmp.eq.s32.totalorder %s19, 0
    %p145 = por %p143, %p144
    %p146 = scmp.ne.s32.totalorder %s134, %s135
    %p147 = scmp.eq.s32.totalorder %s20, 1
    %p148 = por %p146, %p147
    %p150 = scmp.ne.s32.totalorder %s135, %s149
    %p151 = scmp.eq.s32.totalorder %s20, 0
    %p152 = por %p150, %p151
    %s154 = sadd.s32 %s153, 1
    %p157 = scmp.eq.s32.totalorder %s14, 1
    %p158 = scmp.ne.s32.totalorder %s153, %s155
    %p159 = scmp.eq.s32.totalorder %s14, 0
    %p160 = por %p158, %p159
    %p161 = scmp.ne.s32.totalorder %s153, %s155
    %p162 = scmp.eq.s32.totalorder %s19, 1
    %p163 = por %p161, %p162
    %p164 = scmp.ne.s32.totalorder %s155, %s156
    %p165 = scmp.eq.s32.totalorder %s19, 0
    %p166 = por %p164, %p165
    %p167 = scmp.ne.s32.totalorder %s155, %s156
    %p168 = scmp.eq.s32.totalorder %s20, 1
    %p169 = por %p167, %p168
    %p171 = scmp.ne.s32.totalorder %s156, %s170
    %p172 = scmp.eq.s32.totalorder %s20, 0
    %p173 = por %p171, %p172
    %s174 = ssub.s32 %s14, %s21
    %p175 = scmp.eq.s32.totalorder %s174, 0
    %s177 = sadd.s32 %s176, 1
    %s178 = scalar_select %p175, %s176, %s177
    %p181 = pneg %p175
    %p182 = scmp.eq.s32.totalorder %s14, 1
    %p183 = por %p181, %p182
    %p184 = scmp.ne.s32.totalorder %s176, %s179
    %p185 = scmp.eq.s32.totalorder %s14, 0
    %p186 = por %p184, %p185
    %p187 = scmp.ne.s32.totalorder %s176, %s179
    %p188 = scmp.eq.s32.totalorder %s19, 1
    %p189 = por %p187, %p188
    %p190 = scmp.ne.s32.totalorder %s179, %s180
    %p191 = scmp.eq.s32.totalorder %s19, 0
    %p192 = por %p190, %p191
    %p193 = scmp.ne.s32.totalorder %s179, %s180
    %p194 = scmp.eq.s32.totalorder %s20, 1
    %p195 = por %p193, %p194
    %p197 = scmp.ne.s32.totalorder %s180, %s196
    %p198 = scmp.eq.s32.totalorder %s20, 0
    %p199 = por %p197, %p198
    %p200 = scmp.le.s32.totalorder 1, %s14
    %p201 = scmp.lt.s32.totalorder %s14, 3
    %p202 = pnand %p200, %p201
    %p203 = pneg %p202
    // Predicated region
    $region9: #{tpu_custom_call.1} parent=5 // pred_check
      _
    $region10: #{tpu_custom_call.1} parent=5 // pred_check_branch
      %205 = sbr.rel (%p202) target = $region12
    $region11: #{tpu_custom_call.1} parent=5 // pred_region
      %s206 = ssub.s32 %s14, 1
      // Predicated region
      $region13: #{tpu_custom_call.1} parent=11 // pred_check
        %p207 = pneg %p35
      $region14: #{tpu_custom_call.1} parent=11 // pred_check_branch
        %209 = sbr.rel (%p207) target = $region16
      $region15: #{tpu_custom_call.1} parent=11 // pred_region
        _
      $region16: #{tpu_custom_call.1} parent=11 // pred_fallthru
        _
      // Predicated region
      $region17: #{tpu_custom_call.1} parent=11 // pred_check
        %p210 = pneg %p82
      $region18: #{tpu_custom_call.1} parent=11 // pred_check_branch
        %212 = sbr.rel (%p210) target = $region20
      $region19: #{tpu_custom_call.1} parent=11 // pred_region
        _
      $region20: #{tpu_custom_call.1} parent=11 // pred_fallthru
        _
      // Predicated region
      $region21: #{tpu_custom_call.1} parent=11 // pred_check
        %p213 = pneg %p103
      $region22: #{tpu_custom_call.1} parent=11 // pred_check_branch
        %215 = sbr.rel (%p213) target = $region24
      $region23: #{tpu_custom_call.1} parent=11 // pred_region
        _
      $region24: #{tpu_custom_call.1} parent=11 // pred_fallthru
        _
      // Predicated region
      $region25: #{tpu_custom_call.1} parent=11 // pred_check
        %p216 = pneg %p124
      $region26: #{tpu_custom_call.1} parent=11 // pred_check_branch
        %218 = sbr.rel (%p216) target = $region28
      $region27: #{tpu_custom_call.1} parent=11 // pred_region
        _
      $region28: #{tpu_custom_call.1} parent=11 // pred_fallthru
        _
      // Predicated region
      $region29: #{tpu_custom_call.1} parent=11 // pred_check
        %p219 = pneg %p145
      $region30: #{tpu_custom_call.1} parent=11 // pred_check_branch
        %221 = sbr.rel (%p219) target = $region32
      $region31: #{tpu_custom_call.1} parent=11 // pred_region
        _
      $region32: #{tpu_custom_call.1} parent=11 // pred_fallthru
        _
      // Predicated region
      $region33: #{tpu_custom_call.1} parent=11 // pred_check
        %p222 = pneg %p166
      $region34: #{tpu_custom_call.1} parent=11 // pred_check_branch
        %224 = sbr.rel (%p222) target = $region36
      $region35: #{tpu_custom_call.1} parent=11 // pred_region
        _
      $region36: #{tpu_custom_call.1} parent=11 // pred_fallthru
        _
    $region12: #{tpu_custom_call.1} parent=5 // pred_fallthru
      _
    %p225 = scmp.lt.s32.totalorder %s14, 2
    // Predicated region
    $region37: #{tpu_custom_call.1} parent=5 // pred_check
      %p226 = pneg %p225
    $region38: #{tpu_custom_call.1} parent=5 // pred_check_branch
      %228 = sbr.rel (%p226) target = $region40
    $region39: #{tpu_custom_call.1} parent=5 // pred_region
      // Predicated region
      $region41: #{tpu_custom_call.1} parent=39 // pred_check
        %p229 = pneg %p55
      $region42: #{tpu_custom_call.1} parent=39 // pred_check_branch
        %231 = sbr.rel (%p229) target = $region44
      $region43: #{tpu_custom_call.1} parent=39 // pred_region
        %s232 = smul.u32 8, %s14
        %p233 = scmp.lt.s32.totalorder %s232, 15
        %s234 = scalar_select %p233, %s232, 15
        %s235 = smul.addr %s234, 8
        %s236 = scalar_lea.vmem %s1, %s235
        %s237 = smul.u32 8, %s14
      $region44: #{tpu_custom_call.1} parent=39 // pred_fallthru
        _
    $region40: #{tpu_custom_call.1} parent=5 // pred_fallthru
      _
    %p238 = scmp.le.s32.totalorder 1, %s14
    %p239 = scmp.lt.s32.totalorder %s14, 3
    %p240 = pnand %p238, %p239
    %p241 = pneg %p240
    // Predicated region
    $region45: #{tpu_custom_call.1} parent=5 // pred_check
      _
    $region46: #{tpu_custom_call.1} parent=5 // pred_check_branch
      %243 = sbr.rel (%p240) target = $region48
    $region47: #{tpu_custom_call.1} parent=5 // pred_region
      %s244 = ssub.s32 %s14, 1
      %p245 = pneg %p35
      %p246 = pneg %p32
      %s247 = smul.u32 8, %s19
      %p248 = scmp.lt.s32.totalorder %s247, 15
      %s249 = scalar_select %p248, %s247, 15
      %s250 = smul.addr %s249, 8
      %s251 = scalar_lea.vmem %s1, %s250
      %p252 = pneg %p61
      %p253 = pneg %p58
      %p254 = pneg %p82
      %p255 = pneg %p79
      %p256 = pneg %p103
      %p257 = pneg %p100
      %p258 = pneg %p124
      %p259 = pneg %p121
      %p260 = pneg %p145
      %p261 = pneg %p142
      %p262 = pneg %p166
      %p263 = pneg %p163
      %p264 = pneg %p192
      %p265 = pneg %p189
      %s266 = smul.u32 8, %s19
      %p267 = scmp.lt.s32.totalorder %s266, 15
      %s268 = scalar_select %p267, %s266, 15
      %s269 = smul.addr %s268, 8
      %s270 = scalar_lea.vmem %s7, %s269
      %s271 = smul.u32 8, %s19
      %p272 = scmp.lt.s32.totalorder %s271, 15
      %s273 = scalar_select %p272, %s271, 15
      %s274 = smul.addr %s273, 8
      %s275 = scalar_lea.vmem %s1, %s274
      %s276 = smul.u32 8, %s19
      %s277 = smul.u32 8, %s19
      %p278 = scmp.lt.s32.totalorder %s277, 15
      %s279 = scalar_select %p278, %s277, 15
      %s280 = smul.addr %s279, 8
      %s281 = scalar_lea.vmem %s7, %s280
      %s282 = smul.u32 8, %s19
      %s283 = sld [smem:[#allocation4]]
      %v284 = vld [vmem:[%s275] sm:$0xff]
      %v285 = vld [vmem:[%s275 + $0x8] sm:$0xff]
      %v286 = vld [vmem:[%s275 + $0x10] sm:$0xff]
      %v287 = vld [vmem:[%s275 + $0x18] sm:$0xff]
      %v288 = vld [vmem:[%s275 + $0x20] sm:$0xff]
      %v289 = vld [vmem:[%s275 + $0x28] sm:$0xff]
      %v290 = vld [vmem:[%s275 + $0x30] sm:$0xff]
      %v291 = vld [vmem:[%s275 + $0x38] sm:$0xff]
      %v292 = vld [vmem:[%s2] sm:$0xff]
      %v293 = vld [vmem:[%s2 + $0x8] sm:$0xff]
      %v294 = vld [vmem:[%s2 + $0x10] sm:$0xff]
      %v295 = vld [vmem:[%s2 + $0x18] sm:$0xff]
      %v296 = vld [vmem:[%s3] sm:$0x1]
      %v298 = vperm.slane %v296, 0
      %vm300 = vcmask 261120
      %v302 = vsel %vm300, %v284, 0
      %v305 = vsel %vm300, %v285, 0
      %v308 = vsel %vm300, %v286, 0
      %v311 = vsel %vm300, %v287, 0
      %v314 = vsel %vm300, %v288, 0
      %v317 = vsel %vm300, %v289, 0
      %v320 = vsel %vm300, %v290, 0
      %v323 = vsel %vm300, %v291, 0
      %325 = vmatpush.msra.mxu0 0.0
      %326 = vmatpush.msra.mxu0 0.0
      %327 = vmatpush.msra.mxu0 0.0
      %328 = vmatpush.msra.mxu0 0.0
      %329 = vmatpush.msra.mxu0 0.0
      %330 = vmatpush.msra.mxu0 0.0
      %331 = vmatpush.msra.mxu0 0.0
      %332 = vmatpush.msra.mxu0 0.0
      %333 = vmatpush.msra.mxu0 0.0
      %334 = vmatpush.msra.mxu0 0.0
      %335 = vmatpush.msra.mxu0 0.0
      %336 = vmatpush.msra.mxu0 0.0
      %337 = vmatpush.msra.mxu0 %v295
      %338 = vmatpush.msra.mxu0 %v294
      %339 = vmatpush.msra.mxu0 %v293
      %340 = vmatpush.msra.mxu0 %v292
      %341 = vmatmul.f32.gmra.mxu0 %v302
      %v342 = vpop.f32.mrf.mxu0
      %v343 = vadd.f32 %v298, %v342
      %344 = vmatmul.f32.gmra.mxu0 %v305
      %v345 = vpop.f32.mrf.mxu0
      %v346 = vadd.f32 %v298, %v345
      %347 = vmatmul.f32.gmra.mxu0 %v308
      %v348 = vpop.f32.mrf.mxu0
      %v349 = vadd.f32 %v298, %v348
      %350 = vmatmul.f32.gmra.mxu0 %v311
      %v351 = vpop.f32.mrf.mxu0
      %v352 = vadd.f32 %v298, %v351
      %353 = vmatmul.f32.gmra.mxu0 %v314
      %v354 = vpop.f32.mrf.mxu0
      %v355 = vadd.f32 %v298, %v354
      %356 = vmatmul.f32.gmra.mxu0 %v317
      %v357 = vpop.f32.mrf.mxu0
      %v358 = vadd.f32 %v298, %v357
      %359 = vmatmul.f32.gmra.mxu0 %v320
      %v360 = vpop.f32.mrf.mxu0
      %v361 = vadd.f32 %v298, %v360
      %362 = vmatmul.f32.gmra.mxu0 %v323
      %v363 = vpop.f32.mrf.mxu0
      %v364 = vadd.f32 %v298, %v363
      %365 = vdwg.mxu0
      %vm366 = vcmask 785408
      %367 = vst.msk [vmem:[#allocation2] sm:$0xff] %vm366, %v343
      %368 = vst.msk [vmem:[#allocation2 + $0x8] sm:$0xff] %vm366, %v346
      %369 = vst.msk [vmem:[#allocation2 + $0x10] sm:$0xff] %vm366, %v349
      %370 = vst.msk [vmem:[#allocation2 + $0x18] sm:$0xff] %vm366, %v352
      %371 = vst.msk [vmem:[#allocation2 + $0x20] sm:$0xff] %vm366, %v355
      %372 = vst.msk [vmem:[#allocation2 + $0x28] sm:$0xff] %vm366, %v358
      %373 = vst.msk [vmem:[#allocation2 + $0x30] sm:$0xff] %vm366, %v361
      %374 = vst.msk [vmem:[#allocation2 + $0x38] sm:$0xff] %vm366, %v364
      %v375 = vld [vmem:[%s6] sm:$0xff]
      %v376 = vld [vmem:[%s6 + $0x8] sm:$0xff]
      %v377 = vld [vmem:[%s6 + $0x10] sm:$0xff]
      %v378 = vld [vmem:[%s6 + $0x18] sm:$0xff]
      %v379 = vld [vmem:[%s6 + $0x20] sm:$0xff]
      %v380 = vld [vmem:[%s6 + $0x28] sm:$0xff]
      %v381 = vld [vmem:[%s6 + $0x30] sm:$0xff]
      %v382 = vld [vmem:[%s6 + $0x38] sm:$0xff]
      %v383 = vstv %s283
      %v384 = vmul.f32 %v383, %v375
      %v385 = vmul.f32 %v383, %v376
      %v386 = vmul.f32 %v383, %v377
      %v387 = vmul.f32 %v383, %v378
      %v388 = vmul.f32 %v383, %v379
      %v389 = vmul.f32 %v383, %v380
      %v390 = vmul.f32 %v383, %v381
      %v391 = vmul.f32 %v383, %v382
      loop: start=0, step=1, limit=4
      $region49: #{tpu_custom_call.1} parent=47 // loop_pre_header
        _
      $region50: #{tpu_custom_call.1} parent=47 // loop_header
        %s393 = sphi 0, %s397
        %p394 = scmp.ge.s32.totalorder %s393, 4
      $region51: #{tpu_custom_call.1} parent=47 // loop_header_branch
        %396 = sbr.rel (%p394) target = $region55
      $region52: #{tpu_custom_call.1} parent=47 // loop_body
        %s398 = smul.u32 %s393, 16
        %s399 = scalar_lea.vmem [#allocation2], %s398
        %v400 = vld [vmem:[%s399] sm:$0xff]
        %v401 = vld [vmem:[%s399 + $0x8] sm:$0xff]
        %404 = vrot.lane.b32.xlu0 %v400, 120
        %v405 = vpop.permute.xlu0 %404
        %406 = vrot.lane.b32.xlu0 %v401, 120
        %v407 = vpop.permute.xlu0 %406
        %410 = vrot.lane.b32.xlu0 %v400, 112
        %v411 = vpop.permute.xlu0 %410
        %412 = vrot.lane.b32.xlu0 %v401, 112
        %v413 = vpop.permute.xlu0 %412
        %416 = vrot.lane.b32.xlu0 %v400, 104
        %v417 = vpop.permute.xlu0 %416
        %418 = vrot.lane.b32.xlu0 %v401, 104
        %v419 = vpop.permute.xlu0 %418
        %v422 = vmul.f32 %v400, 0.35355338
        %v423 = vmul.f32 %v401, 0.35355338
        %v424 = vmul.f32 %v405, 0.35355338
        %v425 = vmul.f32 %v407, 0.35355338
        %v426 = vmul.f32 %v411, 0.35355338
        %v427 = vmul.f32 %v413, 0.35355338
        %v428 = vmul.f32 %v417, 0.35355338
        %v429 = vmul.f32 %v419, 0.35355338
        %430 = vrot.lane.b32.xlu0 %v400, 96
        %v431 = vpop.permute.xlu0 %430
        %432 = vrot.lane.b32.xlu0 %v401, 96
        %v433 = vpop.permute.xlu0 %432
        %vm434 = vcmask 64512
        %v436 = vsel %vm434, %v422, 0
        %v439 = vsel %vm434, %v423, 0
        %v441 = vsel %vm434, %v431, 0
        %v443 = vsel %vm434, %v433, 0
        %445 = vmatpush.xpose.msra.mxu0 0.0
        %446 = vmatpush.xpose.msra.mxu0 0.0
        %447 = vmatpush.xpose.msra.mxu0 0.0
        %448 = vmatpush.xpose.msra.mxu0 0.0
        %449 = vmatpush.xpose.msra.mxu0 0.0
        %450 = vmatpush.xpose.msra.mxu0 0.0
        %451 = vmatpush.xpose.msra.mxu0 0.0
        %452 = vmatpush.xpose.msra.mxu0 0.0
        %453 = vmatpush.xpose.msra.mxu0 0.0
        %454 = vmatpush.xpose.msra.mxu0 0.0
        %455 = vmatpush.xpose.msra.mxu0 0.0
        %456 = vmatpush.xpose.msra.mxu0 0.0
        %457 = vmatpush.xpose.msra.mxu0 0.0
        %458 = vmatpush.xpose.msra.mxu0 0.0
        %459 = vmatpush.xpose.msra.mxu0 %v443
        %460 = vmatpush.xpose.msra.mxu0 %v441
        %461 = vmatmul.f32.gmra.mxu0 %v436
        %v462 = vpop.f32.mrf.mxu0
        %v463 = vadd.f32 %v384, %v462
        %464 = vmatmul.f32.gmra.mxu0 %v439
        %v465 = vpop.f32.mrf.mxu0
        %v466 = vadd.f32 %v385, %v465
        %467 = vdwg.mxu0
        %468 = vrot.lane.b32.xlu0 %v405, 96
        %v469 = vpop.permute.xlu0 %468
        %470 = vrot.lane.b32.xlu0 %v407, 96
        %v471 = vpop.permute.xlu0 %470
        %v473 = vsel %vm434, %v424, 0
        %v476 = vsel %vm434, %v425, 0
        %v478 = vsel %vm434, %v469, 0
        %v480 = vsel %vm434, %v471, 0
        %482 = vmatpush.xpose.msra.mxu0 0.0
        %483 = vmatpush.xpose.msra.mxu0 0.0
        %484 = vmatpush.xpose.msra.mxu0 0.0
        %485 = vmatpush.xpose.msra.mxu0 0.0
        %486 = vmatpush.xpose.msra.mxu0 0.0
        %487 = vmatpush.xpose.msra.mxu0 0.0
        %488 = vmatpush.xpose.msra.mxu0 0.0
        %489 = vmatpush.xpose.msra.mxu0 0.0
        %490 = vmatpush.xpose.msra.mxu0 0.0
        %491 = vmatpush.xpose.msra.mxu0 0.0
        %492 = vmatpush.xpose.msra.mxu0 0.0
        %493 = vmatpush.xpose.msra.mxu0 0.0
        %494 = vmatpush.xpose.msra.mxu0 0.0
        %495 = vmatpush.xpose.msra.mxu0 0.0
        %496 = vmatpush.xpose.msra.mxu0 %v480
        %497 = vmatpush.xpose.msra.mxu0 %v478
        %498 = vmatmul.f32.gmra.mxu0 %v473
        %v499 = vpop.f32.mrf.mxu0
        %v500 = vadd.f32 %v386, %v499
        %501 = vmatmul.f32.gmra.mxu0 %v476
        %v502 = vpop.f32.mrf.mxu0
        %v503 = vadd.f32 %v387, %v502
        %504 = vdwg.mxu0
        %505 = vrot.lane.b32.xlu0 %v411, 96
        %v506 = vpop.permute.xlu0 %505
        %507 = vrot.lane.b32.xlu0 %v413, 96
        %v508 = vpop.permute.xlu0 %507
        %v510 = vsel %vm434, %v426, 0
        %v513 = vsel %vm434, %v427, 0
        %v515 = vsel %vm434, %v506, 0
        %v517 = vsel %vm434, %v508, 0
        %519 = vmatpush.xpose.msra.mxu0 0.0
        %520 = vmatpush.xpose.msra.mxu0 0.0
        %521 = vmatpush.xpose.msra.mxu0 0.0
        %522 = vmatpush.xpose.msra.mxu0 0.0
        %523 = vmatpush.xpose.msra.mxu0 0.0
        %524 = vmatpush.xpose.msra.mxu0 0.0
        %525 = vmatpush.xpose.msra.mxu0 0.0
        %526 = vmatpush.xpose.msra.mxu0 0.0
        %527 = vmatpush.xpose.msra.mxu0 0.0
        %528 = vmatpush.xpose.msra.mxu0 0.0
        %529 = vmatpush.xpose.msra.mxu0 0.0
        %530 = vmatpush.xpose.msra.mxu0 0.0
        %531 = vmatpush.xpose.msra.mxu0 0.0
        %532 = vmatpush.xpose.msra.mxu0 0.0
        %533 = vmatpush.xpose.msra.mxu0 %v517
        %534 = vmatpush.xpose.msra.mxu0 %v515
        %535 = vmatmul.f32.gmra.mxu0 %v510
        %v536 = vpop.f32.mrf.mxu0
        %v537 = vadd.f32 %v388, %v536
        %538 = vmatmul.f32.gmra.mxu0 %v513
        %v539 = vpop.f32.mrf.mxu0
        %v540 = vadd.f32 %v389, %v539
        %541 = vdwg.mxu0
        %542 = vrot.lane.b32.xlu0 %v417, 96
        %v543 = vpop.permute.xlu0 %542
        %544 = vrot.lane.b32.xlu0 %v419, 96
        %v545 = vpop.permute.xlu0 %544
        %v547 = vsel %vm434, %v428, 0
        %v550 = vsel %vm434, %v429, 0
        %v552 = vsel %vm434, %v543, 0
        %v554 = vsel %vm434, %v545, 0
        %556 = vmatpush.xpose.msra.mxu0 0.0
        %557 = vmatpush.xpose.msra.mxu0 0.0
        %558 = vmatpush.xpose.msra.mxu0 0.0
        %559 = vmatpush.xpose.msra.mxu0 0.0
        %560 = vmatpush.xpose.msra.mxu0 0.0
        %561 = vmatpush.xpose.msra.mxu0 0.0
        %562 = vmatpush.xpose.msra.mxu0 0.0
        %563 = vmatpush.xpose.msra.mxu0 0.0
        %564 = vmatpush.xpose.msra.mxu0 0.0
        %565 = vmatpush.xpose.msra.mxu0 0.0
        %566 = vmatpush.xpose.msra.mxu0 0.0
        %567 = vmatpush.xpose.msra.mxu0 0.0
        %568 = vmatpush.xpose.msra.mxu0 0.0
        %569 = vmatpush.xpose.msra.mxu0 0.0
        %570 = vmatpush.xpose.msra.mxu0 %v554
        %571 = vmatpush.xpose.msra.mxu0 %v552
        %572 = vmatmul.f32.gmra.mxu0 %v547
        %v573 = vpop.f32.mrf.mxu0
        %v574 = vadd.f32 %v390, %v573
        %575 = vmatmul.f32.gmra.mxu0 %v550
        %v576 = vpop.f32.mrf.mxu0
        %v577 = vadd.f32 %v391, %v576
        %578 = vdwg.mxu0
        %vm579 = vcmask 130048
        %v580 = vsel %vm579, %v463, -inf
        %581 = vmax.xlane.f32.xlu0 %v580
        %v582 = vpop.xlane.xlu0 %581
        %v583 = vsel %vm579, %v466, -inf
        %584 = vmax.xlane.f32.xlu0 %v583
        %v585 = vpop.xlane.xlu0 %584
        %v586 = vsel %vm579, %v500, -inf
        %587 = vmax.xlane.f32.xlu0 %v586
        %v588 = vpop.xlane.xlu0 %587
        %v589 = vsel %vm579, %v503, -inf
        %590 = vmax.xlane.f32.xlu0 %v589
        %v591 = vpop.xlane.xlu0 %590
        %v592 = vsel %vm579, %v537, -inf
        %593 = vmax.xlane.f32.xlu0 %v592
        %v594 = vpop.xlane.xlu0 %593
        %v595 = vsel %vm579, %v540, -inf
        %596 = vmax.xlane.f32.xlu0 %v595
        %v597 = vpop.xlane.xlu0 %596
        %v598 = vsel %vm579, %v574, -inf
        %599 = vmax.xlane.f32.xlu0 %v598
        %v600 = vpop.xlane.xlu0 %599
        %v601 = vsel %vm579, %v577, -inf
        %602 = vmax.xlane.f32.xlu0 %v601
        %v603 = vpop.xlane.xlu0 %602
        %v604 = vsub.f32 %v463, %v582
        %v605 = vsub.f32 %v466, %v585
        %v606 = vsub.f32 %v500, %v588
        %v607 = vsub.f32 %v503, %v591
        %v608 = vsub.f32 %v537, %v594
        %v609 = vsub.f32 %v540, %v597
        %v610 = vsub.f32 %v574, %v600
        %v611 = vsub.f32 %v577, %v603
        %v612 = vmul.f32 %v604, 1.442695
        %v613 = vpow.pop %v612
        %v614 = vmul.f32 %v605, 1.442695
        %v615 = vpow.pop %v614
        %v616 = vmul.f32 %v606, 1.442695
        %v617 = vpow.pop %v616
        %v618 = vmul.f32 %v607, 1.442695
        %v619 = vpow.pop %v618
        %v620 = vmul.f32 %v608, 1.442695
        %v621 = vpow.pop %v620
        %v622 = vmul.f32 %v609, 1.442695
        %v623 = vpow.pop %v622
        %v624 = vmul.f32 %v610, 1.442695
        %v625 = vpow.pop %v624
        %v626 = vmul.f32 %v611, 1.442695
        %v627 = vpow.pop %v626
        %v628 = vsel %vm579, %v613, 0.0
        %629 = vadd.xlane.f32.xlu0 %v628
        %v630 = vpop.xlane.xlu0 %629
        %v631 = vsel %vm579, %v615, 0.0
        %632 = vadd.xlane.f32.xlu0 %v631
        %v633 = vpop.xlane.xlu0 %632
        %v634 = vsel %vm579, %v617, 0.0
        %635 = vadd.xlane.f32.xlu0 %v634
        %v636 = vpop.xlane.xlu0 %635
        %v637 = vsel %vm579, %v619, 0.0
        %638 = vadd.xlane.f32.xlu0 %v637
        %v639 = vpop.xlane.xlu0 %638
        %v640 = vsel %vm579, %v621, 0.0
        %641 = vadd.xlane.f32.xlu0 %v640
        %v642 = vpop.xlane.xlu0 %641
        %v643 = vsel %vm579, %v623, 0.0
        %644 = vadd.xlane.f32.xlu0 %v643
        %v645 = vpop.xlane.xlu0 %644
        %v646 = vsel %vm579, %v625, 0.0
        %647 = vadd.xlane.f32.xlu0 %v646
        %v648 = vpop.xlane.xlu0 %647
        %v649 = vsel %vm579, %v627, 0.0
        %650 = vadd.xlane.f32.xlu0 %v649
        %v651 = vpop.xlane.xlu0 %650
        %652 = vrot.lane.b32.xlu0 %v400, 64
        %v653 = vpop.permute.xlu0 %652
        %654 = vrot.lane.b32.xlu0 %v401, 64
        %v655 = vpop.permute.xlu0 %654
        %v659 = vsel %vm579, %v613, 0
        %v662 = vsel %vm579, %v615, 0
        %664 = vmatpush.msra.mxu0 0.0
        %665 = vmatpush.msra.mxu0 0.0
        %666 = vmatpush.msra.mxu0 0.0
        %667 = vmatpush.msra.mxu0 0.0
        %668 = vmatpush.msra.mxu0 0.0
        %669 = vmatpush.msra.mxu0 0.0
        %670 = vmatpush.msra.mxu0 0.0
        %671 = vmatpush.msra.mxu0 0.0
        %672 = vmatpush.msra.mxu0 0.0
        %673 = vmatpush.msra.mxu0 0.0
        %674 = vmatpush.msra.mxu0 0.0
        %675 = vmatpush.msra.mxu0 0.0
        %676 = vmatpush.msra.mxu0 0.0
        %677 = vmatpush.msra.mxu0 0.0
        %678 = vmatpush.msra.mxu0 %v655
        %679 = vmatpush.msra.mxu0 %v653
        %680 = vmatmul.f32.gmra.mxu0 %v659
        %v681 = vpop.f32.mrf.mxu0
        %v682 = vadd.f32 0.0, %v681
        %683 = vmatmul.f32.gmra.mxu0 %v662
        %v684 = vpop.f32.mrf.mxu0
        %v685 = vadd.f32 0.0, %v684
        %686 = vdwg.mxu0
        %687 = vrot.lane.b32.xlu0 %v405, 64
        %v688 = vpop.permute.xlu0 %687
        %689 = vrot.lane.b32.xlu0 %v407, 64
        %v690 = vpop.permute.xlu0 %689
        %v694 = vsel %vm579, %v617, 0
        %v697 = vsel %vm579, %v619, 0
        %699 = vmatpush.msra.mxu0 0.0
        %700 = vmatpush.msra.mxu0 0.0
        %701 = vmatpush.msra.mxu0 0.0
        %702 = vmatpush.msra.mxu0 0.0
        %703 = vmatpush.msra.mxu0 0.0
        %704 = vmatpush.msra.mxu0 0.0
        %705 = vmatpush.msra.mxu0 0.0
        %706 = vmatpush.msra.mxu0 0.0
        %707 = vmatpush.msra.mxu0 0.0
        %708 = vmatpush.msra.mxu0 0.0
        %709 = vmatpush.msra.mxu0 0.0
        %710 = vmatpush.msra.mxu0 0.0
        %711 = vmatpush.msra.mxu0 0.0
        %712 = vmatpush.msra.mxu0 0.0
        %713 = vmatpush.msra.mxu0 %v690
        %714 = vmatpush.msra.mxu0 %v688
        %715 = vmatmul.f32.gmra.mxu0 %v694
        %v716 = vpop.f32.mrf.mxu0
        %v717 = vadd.f32 0.0, %v716
        %718 = vmatmul.f32.gmra.mxu0 %v697
        %v719 = vpop.f32.mrf.mxu0
        %v720 = vadd.f32 0.0, %v719
        %721 = vdwg.mxu0
        %722 = vrot.lane.b32.xlu0 %v411, 64
        %v723 = vpop.permute.xlu0 %722
        %724 = vrot.lane.b32.xlu0 %v413, 64
        %v725 = vpop.permute.xlu0 %724
        %v729 = vsel %vm579, %v621, 0
        %v732 = vsel %vm579, %v623, 0
        %734 = vmatpush.msra.mxu0 0.0
        %735 = vmatpush.msra.mxu0 0.0
        %736 = vmatpush.msra.mxu0 0.0
        %737 = vmatpush.msra.mxu0 0.0
        %738 = vmatpush.msra.mxu0 0.0
        %739 = vmatpush.msra.mxu0 0.0
        %740 = vmatpush.msra.mxu0 0.0
        %741 = vmatpush.msra.mxu0 0.0
        %742 = vmatpush.msra.mxu0 0.0
        %743 = vmatpush.msra.mxu0 0.0
        %744 = vmatpush.msra.mxu0 0.0
        %745 = vmatpush.msra.mxu0 0.0
        %746 = vmatpush.msra.mxu0 0.0
        %747 = vmatpush.msra.mxu0 0.0
        %748 = vmatpush.msra.mxu0 %v725
        %749 = vmatpush.msra.mxu0 %v723
        %750 = vmatmul.f32.gmra.mxu0 %v729
        %v751 = vpop.f32.mrf.mxu0
        %v752 = vadd.f32 0.0, %v751
        %753 = vmatmul.f32.gmra.mxu0 %v732
        %v754 = vpop.f32.mrf.mxu0
        %v755 = vadd.f32 0.0, %v754
        %756 = vdwg.mxu0
        %757 = vrot.lane.b32.xlu0 %v417, 64
        %v758 = vpop.permute.xlu0 %757
        %759 = vrot.lane.b32.xlu0 %v419, 64
        %v760 = vpop.permute.xlu0 %759
        %v764 = vsel %vm579, %v625, 0
        %v767 = vsel %vm579, %v627, 0
        %769 = vmatpush.msra.mxu0 0.0
        %770 = vmatpush.msra.mxu0 0.0
        %771 = vmatpush.msra.mxu0 0.0
        %772 = vmatpush.msra.mxu0 0.0
        %773 = vmatpush.msra.mxu0 0.0
        %774 = vmatpush.msra.mxu0 0.0
        %775 = vmatpush.msra.mxu0 0.0
        %776 = vmatpush.msra.mxu0 0.0
        %777 = vmatpush.msra.mxu0 0.0
        %778 = vmatpush.msra.mxu0 0.0
        %779 = vmatpush.msra.mxu0 0.0
        %780 = vmatpush.msra.mxu0 0.0
        %781 = vmatpush.msra.mxu0 0.0
        %782 = vmatpush.msra.mxu0 0.0
        %783 = vmatpush.msra.mxu0 %v760
        %784 = vmatpush.msra.mxu0 %v758
        %785 = vmatmul.f32.gmra.mxu0 %v764
        %v786 = vpop.f32.mrf.mxu0
        %v787 = vadd.f32 0.0, %v786
        %788 = vmatmul.f32.gmra.mxu0 %v767
        %v789 = vpop.f32.mrf.mxu0
        %v790 = vadd.f32 0.0, %v789
        %791 = vdwg.mxu0
        %v792 = vrcp.pop %v630
        %v793 = vmul.f32 %v630, %v792
        %v794 = vsub.f32 1.0, %v793
        %v795 = vmul.f32 %v792, %v794
        %v796 = vadd.f32 %v792, %v795
        %vm797 = vweird.f32 %v630
        %vm798 = vweird.f32 %v792
        %vm799 = vmor %vm797, %vm798
        %v800 = vsel %vm799, %v792, %v796
        %v801 = vand.u32 2147483647, %v630
        %vm802 = vcmp.eq.f32.partialorder %v801, 8.507059e+37
        %v803 = vand.u32 %v630, 2147483648
        %v804 = vor.u32 1.1754944e-38, %v803
        %v805 = vsel %vm802, %v804, %v800
        %v806 = vrcp.pop %v633
        %v807 = vmul.f32 %v633, %v806
        %v808 = vsub.f32 1.0, %v807
        %v809 = vmul.f32 %v806, %v808
        %v810 = vadd.f32 %v806, %v809
        %vm811 = vweird.f32 %v633
        %vm812 = vweird.f32 %v806
        %vm813 = vmor %vm811, %vm812
        %v814 = vsel %vm813, %v806, %v810
        %v815 = vand.u32 2147483647, %v633
        %vm816 = vcmp.eq.f32.partialorder %v815, 8.507059e+37
        %v817 = vand.u32 %v633, 2147483648
        %v818 = vor.u32 1.1754944e-38, %v817
        %v819 = vsel %vm816, %v818, %v814
        %v820 = vrcp.pop %v636
        %v821 = vmul.f32 %v636, %v820
        %v822 = vsub.f32 1.0, %v821
        %v823 = vmul.f32 %v820, %v822
        %v824 = vadd.f32 %v820, %v823
        %vm825 = vweird.f32 %v636
        %vm826 = vweird.f32 %v820
        %vm827 = vmor %vm825, %vm826
        %v828 = vsel %vm827, %v820, %v824
        %v829 = vand.u32 2147483647, %v636
        %vm830 = vcmp.eq.f32.partialorder %v829, 8.507059e+37
        %v831 = vand.u32 %v636, 2147483648
        %v832 = vor.u32 1.1754944e-38, %v831
        %v833 = vsel %vm830, %v832, %v828
        %v834 = vrcp.pop %v639
        %v835 = vmul.f32 %v639, %v834
        %v836 = vsub.f32 1.0, %v835
        %v837 = vmul.f32 %v834, %v836
        %v838 = vadd.f32 %v834, %v837
        %vm839 = vweird.f32 %v639
        %vm840 = vweird.f32 %v834
        %vm841 = vmor %vm839, %vm840
        %v842 = vsel %vm841, %v834, %v838
        %v843 = vand.u32 2147483647, %v639
        %vm844 = vcmp.eq.f32.partialorder %v843, 8.507059e+37
        %v845 = vand.u32 %v639, 2147483648
        %v846 = vor.u32 1.1754944e-38, %v845
        %v847 = vsel %vm844, %v846, %v842
        %v848 = vrcp.pop %v642
        %v849 = vmul.f32 %v642, %v848
        %v850 = vsub.f32 1.0, %v849
        %v851 = vmul.f32 %v848, %v850
        %v852 = vadd.f32 %v848, %v851
        %vm853 = vweird.f32 %v642
        %vm854 = vweird.f32 %v848
        %vm855 = vmor %vm853, %vm854
        %v856 = vsel %vm855, %v848, %v852
        %v857 = vand.u32 2147483647, %v642
        %vm858 = vcmp.eq.f32.partialorder %v857, 8.507059e+37
        %v859 = vand.u32 %v642, 2147483648
        %v860 = vor.u32 1.1754944e-38, %v859
        %v861 = vsel %vm858, %v860, %v856
        %v862 = vrcp.pop %v645
        %v863 = vmul.f32 %v645, %v862
        %v864 = vsub.f32 1.0, %v863
        %v865 = vmul.f32 %v862, %v864
        %v866 = vadd.f32 %v862, %v865
        %vm867 = vweird.f32 %v645
        %vm868 = vweird.f32 %v862
        %vm869 = vmor %vm867, %vm868
        %v870 = vsel %vm869, %v862, %v866
        %v871 = vand.u32 2147483647, %v645
        %vm872 = vcmp.eq.f32.partialorder %v871, 8.507059e+37
        %v873 = vand.u32 %v645, 2147483648
        %v874 = vor.u32 1.1754944e-38, %v873
        %v875 = vsel %vm872, %v874, %v870
        %v876 = vrcp.pop %v648
        %v877 = vmul.f32 %v648, %v876
        %v878 = vsub.f32 1.0, %v877
        %v879 = vmul.f32 %v876, %v878
        %v880 = vadd.f32 %v876, %v879
        %vm881 = vweird.f32 %v648
        %vm882 = vweird.f32 %v876
        %vm883 = vmor %vm881, %vm882
        %v884 = vsel %vm883, %v876, %v880
        %v885 = vand.u32 2147483647, %v648
        %vm886 = vcmp.eq.f32.partialorder %v885, 8.507059e+37
        %v887 = vand.u32 %v648, 2147483648
        %v888 = vor.u32 1.1754944e-38, %v887
        %v889 = vsel %vm886, %v888, %v884
        %v890 = vrcp.pop %v651
        %v891 = vmul.f32 %v651, %v890
        %v892 = vsub.f32 1.0, %v891
        %v893 = vmul.f32 %v890, %v892
        %v894 = vadd.f32 %v890, %v893
        %vm895 = vweird.f32 %v651
        %vm896 = vweird.f32 %v890
        %vm897 = vmor %vm895, %vm896
        %v898 = vsel %vm897, %v890, %v894
        %v899 = vand.u32 2147483647, %v651
        %vm900 = vcmp.eq.f32.partialorder %v899, 8.507059e+37
        %v901 = vand.u32 %v651, 2147483648
        %v902 = vor.u32 1.1754944e-38, %v901
        %v903 = vsel %vm900, %v902, %v898
        %v904 = vmul.f32 %v682, %v805
        %v905 = vmul.f32 %v685, %v819
        %v906 = vmul.f32 %v717, %v833
        %v907 = vmul.f32 %v720, %v847
        %v908 = vmul.f32 %v752, %v861
        %v909 = vmul.f32 %v755, %v875
        %v910 = vmul.f32 %v787, %v889
        %v911 = vmul.f32 %v790, %v903
        %s912 = scalar_lea.vmem [#allocation3], %s398
        %913 = vst.msk [vmem:[%s912] sm:$0xff] %vm434, %v904
        %914 = vst.msk [vmem:[%s912 + $0x8] sm:$0xff] %vm434, %v905
        %917 = vrot.lane.b32.xlu0 %v906, 8
        %v918 = vpop.permute.xlu0 %917
        %919 = vrot.lane.b32.xlu0 %v907, 8
        %v920 = vpop.permute.xlu0 %919
        %vm923 = vcmask 130112
        %924 = vst.msk [vmem:[%s912] sm:$0xff] %vm923, %v918
        %925 = vst.msk [vmem:[%s912 + $0x8] sm:$0xff] %vm923, %v920
        %928 = vrot.lane.b32.xlu0 %v908, 16
        %v929 = vpop.permute.xlu0 %928
        %930 = vrot.lane.b32.xlu0 %v909, 16
        %v931 = vpop.permute.xlu0 %930
        %vm934 = vcmask 195712
        %935 = vst.msk [vmem:[%s912] sm:$0xff] %vm934, %v929
        %936 = vst.msk [vmem:[%s912 + $0x8] sm:$0xff] %vm934, %v931
        %939 = vrot.lane.b32.xlu0 %v910, 24
        %v940 = vpop.permute.xlu0 %939
        %941 = vrot.lane.b32.xlu0 %v911, 24
        %v942 = vpop.permute.xlu0 %941
        %vm945 = vcmask 261312
        %946 = vst.msk [vmem:[%s912] sm:$0xff] %vm945, %v940
        %947 = vst.msk [vmem:[%s912 + $0x8] sm:$0xff] %vm945, %v942
      $region53: #{tpu_custom_call.1} parent=47 // loop_footer
        %s397 = sadd.s32 1, %s393
      $region54: #{tpu_custom_call.1} parent=47 // loop_footer_branch
        %392 = sbr.rel target = $region50
      $region55: #{tpu_custom_call.1} parent=47 // loop_exit
        _
      %v948 = vld [vmem:[#allocation3] sm:$0xff]
      %v949 = vld [vmem:[#allocation3 + $0x8] sm:$0xff]
      %v950 = vld [vmem:[#allocation3 + $0x10] sm:$0xff]
      %v951 = vld [vmem:[#allocation3 + $0x18] sm:$0xff]
      %v952 = vld [vmem:[#allocation3 + $0x20] sm:$0xff]
      %v953 = vld [vmem:[#allocation3 + $0x28] sm:$0xff]
      %v954 = vld [vmem:[#allocation3 + $0x30] sm:$0xff]
      %v955 = vld [vmem:[#allocation3 + $0x38] sm:$0xff]
      %v956 = vld [vmem:[%s4] sm:$0xff]
      %v957 = vld [vmem:[%s4 + $0x8] sm:$0xff]
      %v958 = vld [vmem:[%s4 + $0x10] sm:$0xff]
      %v959 = vld [vmem:[%s4 + $0x18] sm:$0xff]
      %v960 = vld [vmem:[%s5] sm:$0x1]
      %v962 = vperm.slane %v960, 0
      %v965 = vsel %vm300, %v948, 0
      %v968 = vsel %vm300, %v949, 0
      %v971 = vsel %vm300, %v950, 0
      %v974 = vsel %vm300, %v951, 0
      %v977 = vsel %vm300, %v952, 0
      %v980 = vsel %vm300, %v953, 0
      %v983 = vsel %vm300, %v954, 0
      %v986 = vsel %vm300, %v955, 0
      %988 = vmatpush.msra.mxu0 0.0
      %989 = vmatpush.msra.mxu0 0.0
      %990 = vmatpush.msra.mxu0 0.0
      %991 = vmatpush.msra.mxu0 0.0
      %992 = vmatpush.msra.mxu0 0.0
      %993 = vmatpush.msra.mxu0 0.0
      %994 = vmatpush.msra.mxu0 0.0
      %995 = vmatpush.msra.mxu0 0.0
      %996 = vmatpush.msra.mxu0 0.0
      %997 = vmatpush.msra.mxu0 0.0
      %998 = vmatpush.msra.mxu0 0.0
      %999 = vmatpush.msra.mxu0 0.0
      %1000 = vmatpush.msra.mxu0 %v959
      %1001 = vmatpush.msra.mxu0 %v958
      %1002 = vmatpush.msra.mxu0 %v957
      %1003 = vmatpush.msra.mxu0 %v956
      %1004 = vmatmul.f32.gmra.mxu0 %v965
      %v1005 = vpop.f32.mrf.mxu0
      %v1006 = vadd.f32 %v962, %v1005
      %1007 = vmatmul.f32.gmra.mxu0 %v968
      %v1008 = vpop.f32.mrf.mxu0
      %v1009 = vadd.f32 %v962, %v1008
      %1010 = vmatmul.f32.gmra.mxu0 %v971
      %v1011 = vpop.f32.mrf.mxu0
      %v1012 = vadd.f32 %v962, %v1011
      %1013 = vmatmul.f32.gmra.mxu0 %v974
      %v1014 = vpop.f32.mrf.mxu0
      %v1015 = vadd.f32 %v962, %v1014
      %1016 = vmatmul.f32.gmra.mxu0 %v977
      %v1017 = vpop.f32.mrf.mxu0
      %v1018 = vadd.f32 %v962, %v1017
      %1019 = vmatmul.f32.gmra.mxu0 %v980
      %v1020 = vpop.f32.mrf.mxu0
      %v1021 = vadd.f32 %v962, %v1020
      %1022 = vmatmul.f32.gmra.mxu0 %v983
      %v1023 = vpop.f32.mrf.mxu0
      %v1024 = vadd.f32 %v962, %v1023
      %1025 = vmatmul.f32.gmra.mxu0 %v986
      %v1026 = vpop.f32.mrf.mxu0
      %v1027 = vadd.f32 %v962, %v1026
      %1028 = vdwg.mxu0
      %1029 = vst.msk [vmem:[%s281] sm:$0xff] %vm300, %v1006
      %1030 = vst.msk [vmem:[%s281 + $0x8] sm:$0xff] %vm300, %v1009
      %1031 = vst.msk [vmem:[%s281 + $0x10] sm:$0xff] %vm300, %v1012
      %1032 = vst.msk [vmem:[%s281 + $0x18] sm:$0xff] %vm300, %v1015
      %1033 = vst.msk [vmem:[%s281 + $0x20] sm:$0xff] %vm300, %v1018
      %1034 = vst.msk [vmem:[%s281 + $0x28] sm:$0xff] %vm300, %v1021
      %1035 = vst.msk [vmem:[%s281 + $0x30] sm:$0xff] %vm300, %v1024
      %1036 = vst.msk [vmem:[%s281 + $0x38] sm:$0xff] %vm300, %v1027
      %s1037 = smul.u32 8, %s19
      %p1038 = scmp.lt.s32.totalorder %s1037, 15
      %s1039 = scalar_select %p1038, %s1037, 15
      %s1040 = smul.addr %s1039, 8
      %s1041 = scalar_lea.vmem %s7, %s1040
      // Predicated region
      $region56: #{tpu_custom_call.1} parent=47 // pred_check
        %p1042 = pneg %p189
      $region57: #{tpu_custom_call.1} parent=47 // pred_check_branch
        %1044 = sbr.rel (%p1042) target = $region59
      $region58: #{tpu_custom_call.1} parent=47 // pred_region
        %s1045 = smul.u32 8, %s19
      $region59: #{tpu_custom_call.1} parent=47 // pred_fallthru
        _
    $region48: #{tpu_custom_call.1} parent=5 // pred_fallthru
      _
    %p1046 = scmp.le.s32.totalorder 2, %s14
    // Predicated region
    $region60: #{tpu_custom_call.1} parent=5 // pred_check
      %p1047 = pneg %p1046
    $region61: #{tpu_custom_call.1} parent=5 // pred_check_branch
      %1049 = sbr.rel (%p1047) target = $region63
    $region62: #{tpu_custom_call.1} parent=5 // pred_region
      %s1050 = ssub.s32 %s14, 2
      // Predicated region
      $region64: #{tpu_custom_call.1} parent=62 // pred_check
        %p1051 = pneg %p195
      $region65: #{tpu_custom_call.1} parent=62 // pred_check_branch
        %1053 = sbr.rel (%p1051) target = $region67
      $region66: #{tpu_custom_call.1} parent=62 // pred_region
        %s1054 = smul.u32 8, %s20
        %p1055 = scmp.lt.s32.totalorder %s1054, 15
        %s1056 = scalar_select %p1055, %s1054, 15
        %s1057 = smul.addr %s1056, 8
        %s1058 = scalar_lea.vmem %s7, %s1057
      $region67: #{tpu_custom_call.1} parent=62 // pred_fallthru
        _
    $region63: #{tpu_custom_call.1} parent=5 // pred_fallthru
      _
  $region6: #{tpu_custom_call.1} parent=0 // loop_footer
    %s18 = sadd.s32 1, %s14
  $region7: #{tpu_custom_call.1} parent=0 // loop_footer_branch
    %13 = sbr.rel target = $region3
  $region8: #{tpu_custom_call.1} parent=0 // loop_exit
    _

</llo_original>
